<compile_context>
chip_gen: v7x
topology: tpu7x:2x2x1
jax: 0.10.0
libtpu: 0.0.40
codegen_flags: <defaults>
</compile_context>

<pallas_src>
import functools

import jax
import jax.numpy as jnp
from jax import lax
from jax.experimental import pallas as pl
from jax.experimental.pallas import tpu as pltpu


def _round_up(a, b):
    return (a + b - 1) // b * b


def _hsic_tile_kernel(xi_ref, xj_ref, yi_ref, yj_ref,
                      xsqi_ref, xsqj_ref, ysqi_ref, ysqj_ref,
                      trace_ref, rsk_ref, rsl_ref,
                      *, gamma_x, gamma_y, n, tile_n, mask_cols):
    """One (i_block, j_block) tile of the Gram matrices.

    xi_ref/yi_ref: (T, D) row block i;  xj_ref/yj_ref: (T, D) row block j.
    xsqi_ref/ysqi_ref: (T, 1) squared norms of block i;
    xsqj_ref/ysqj_ref: (1, T) squared norms of block j.
    Outputs (all (T, 1), resident across the j grid axis):
      trace_ref[r] += sum_j tK[r, j] * tL[r, j]   (== trace(tK @ tL) partials)
      rsk_ref[r]   += sum_j tK[r, j]
      rsl_ref[r]   += sum_j tL[r, j]
    """
    j = pl.program_id(1)

    @pl.when(j == 0)
    def _init():
        trace_ref[...] = jnp.zeros_like(trace_ref)
        rsk_ref[...] = jnp.zeros_like(rsk_ref)
        rsl_ref[...] = jnp.zeros_like(rsl_ref)

    # Gram tiles on the MXU: contract the feature axis directly (no transpose).
    dims = (((1,), (1,)), ((), ()))
    xx = lax.dot_general(xi_ref[...], xj_ref[...], dims,
                         preferred_element_type=jnp.float32)     # (T, T)
    yy = lax.dot_general(yi_ref[...], yj_ref[...], dims,
                         preferred_element_type=jnp.float32)     # (T, T)

    dx = xsqi_ref[...] + xsqj_ref[...] - 2.0 * xx                # (T, T) f32
    dy = ysqi_ref[...] + ysqj_ref[...] - 2.0 * yy

    # RBF diagonal is exp(0) == 1, so  tK = K - diag(K)[None, :]  ==  K - 1.
    t_k = jnp.exp(-gamma_x * dx) - 1.0
    t_l = jnp.exp(-gamma_y * dy) - 1.0

    if mask_cols:
        # Zero out padded columns (j >= n); padded rows are dropped by the
        # wrapper when it slices the per-row outputs to [:n].
        col = j * tile_n + lax.broadcasted_iota(jnp.int32, (1, tile_n), 1)
        valid = col < n
        t_k = jnp.where(valid, t_k, 0.0)
        t_l = jnp.where(valid, t_l, 0.0)

    trace_ref[...] += jnp.sum(t_k * t_l, axis=1, keepdims=True)
    rsk_ref[...] += jnp.sum(t_k, axis=1, keepdims=True)
    rsl_ref[...] += jnp.sum(t_l, axis=1, keepdims=True)


def hsic_unbiased(x, y, sigma_x, sigma_y=None, tile=None):
    """HSIC(X, Y), unbiased estimator, Gaussian RBF kernels.

    x: (N, ...), y: (N, ...); flattened to (N, D) like the PyTorch module.
    Note: for tiny N (< ~128) inside a training loop, either batch several
    HSIC instances into one pallas_call or use the pure-JAX reference; a
    single tiny call is dominated by dispatch overhead.
    """
    if sigma_y is None:
        sigma_y = sigma_x
    x = x.reshape(x.shape[0], -1)
    y = y.reshape(y.shape[0], -1)
    n = x.shape[0]
    assert n > 3, "unbiased HSIC estimator requires N > 3"
    gamma_x = 1.0 / (2.0 * float(sigma_x) ** 2)
    gamma_y = 1.0 / (2.0 * float(sigma_y) ** 2)

    itemsize = jnp.dtype(x.dtype).itemsize
    dx_pad = _round_up(max(x.shape[1], 1), 128)   # lane-align the feature axis
    dy_pad = _round_up(max(y.shape[1], 1), 128)

    # --- tile selection (MXU / VMEM friendly) -------------------------------
    if tile is None:
        if n <= 256:
            tile = _round_up(n, 8)                # single block per axis
        else:
            # double-buffered Xi/Xj/Yi/Yj row blocks must fit a modest budget
            # (v7x only has 64 MiB of VMEM).
            row_bytes = (dx_pad + dy_pad) * itemsize
            tile = 256 if 4 * 256 * row_bytes <= 24 * (1 << 20) else 128
    else:
        if tile < n:
            assert tile % 128 == 0, "multi-block tile must be a multiple of 128"
        else:
            tile = _round_up(n, 8)
    n_pad = _round_up(n, tile)
    num_blocks = n_pad // tile

    # --- pad inputs (zeros: do not change dot products / norms) -------------
    xp = jnp.pad(x, ((0, n_pad - n), (0, dx_pad - x.shape[1])))
    yp = jnp.pad(y, ((0, n_pad - n), (0, dy_pad - y.shape[1])))

    # Squared norms once, in the wrapper (avoids per-tile recompute + in-kernel
    # sublane->lane relayouts).
    xsq = jnp.sum(xp.astype(jnp.float32) ** 2, axis=1)
    ysq = jnp.sum(yp.astype(jnp.float32) ** 2, axis=1)
    xsq_i, xsq_j = xsq[:, None], xsq[None, :]
    ysq_i, ysq_j = ysq[:, None], ysq[None, :]

    kernel = functools.partial(
        _hsic_tile_kernel, gamma_x=gamma_x, gamma_y=gamma_y,
        n=n, tile_n=tile, mask_cols=(n_pad != n))

    # VMEM budget: double-buffered row blocks + f32 tile temporaries.
    est = 4 * tile * (dx_pad + dy_pad) * itemsize
    est += 8 * tile * tile * 4
    est += 1 << 20
    vmem_limit = int(max(32 << 20, min(2 * est, 64 << 20)))

    grid_spec = pltpu.PrefetchScalarGridSpec(
        num_scalar_prefetch=0,
        grid=(num_blocks, num_blocks),
        in_specs=[
            pl.BlockSpec((tile, dx_pad), lambda i, j: (i, 0)),   # X_i
            pl.BlockSpec((tile, dx_pad), lambda i, j: (j, 0)),   # X_j
            pl.BlockSpec((tile, dy_pad), lambda i, j: (i, 0)),   # Y_i
            pl.BlockSpec((tile, dy_pad), lambda i, j: (j, 0)),   # Y_j
            pl.BlockSpec((tile, 1), lambda i, j: (i, 0)),        # ||x_i||^2
            pl.BlockSpec((1, tile), lambda i, j: (0, j)),        # ||x_j||^2
            pl.BlockSpec((tile, 1), lambda i, j: (i, 0)),        # ||y_i||^2
            pl.BlockSpec((1, tile), lambda i, j: (0, j)),        # ||y_j||^2
        ],
        out_specs=(
            pl.BlockSpec((tile, 1), lambda i, j: (i, 0)),        # trace rows
            pl.BlockSpec((tile, 1), lambda i, j: (i, 0)),        # row sums tK
            pl.BlockSpec((tile, 1), lambda i, j: (i, 0)),        # row sums tL
        ),
    )

    trace_rows, rsk, rsl = pl.pallas_call(
        kernel,
        out_shape=(
            jax.ShapeDtypeStruct((n_pad, 1), jnp.float32),
            jax.ShapeDtypeStruct((n_pad, 1), jnp.float32),
            jax.ShapeDtypeStruct((n_pad, 1), jnp.float32),
        ),
        grid_spec=grid_spec,
        compiler_params=pltpu.CompilerParams(
            dimension_semantics=("parallel", "arbitrary"),
            vmem_limit_bytes=vmem_limit),
    )(xp, xp, yp, yp, xsq_i, xsq_j, ysq_i, ysq_j)

    # --- tiny final combine (scalar work) in plain JAX -----------------------
    tr = jnp.sum(trace_rows[:n, 0])           # trace(tK @ tL)
    sk = rsk[:n, 0]                           # row sums == col sums (symmetry)
    sl = rsl[:n, 0]
    nf = float(n)
    hsic = (tr
            + jnp.sum(sk) * jnp.sum(sl) / ((nf - 1.0) * (nf - 2.0))
            - 2.0 * jnp.dot(sk, sl) / (nf - 2.0))
    return hsic / (nf * (nf - 3.0))


def _hsic_unbiased_ref(x, y, sigma_x, sigma_y):
    """Pure-JAX reference mirroring the PyTorch forward exactly."""
    x = x.reshape(x.shape[0], -1).astype(jnp.float32)
    y = y.reshape(y.shape[0], -1).astype(jnp.float32)
    n = x.shape[0]

    def rbf(Z, sigma):
        ZZ = Z @ Z.T
        sq = jnp.diag(ZZ)
        l2 = -2.0 * ZZ + sq[:, None] + sq[None, :]
        return jnp.exp(-l2 / (2.0 * sigma ** 2))

    K = rbf(x, sigma_x)
    L = rbf(y, sigma_y)
    tK = K - jnp.diag(K)[None, :]   # torch: K - torch.diag(K) (row-broadcast)
    tL = L - jnp.diag(L)[None, :]
    hsic = (jnp.trace(tK @ tL)
            + jnp.sum(tK) * jnp.sum(tL) / (n - 1) / (n - 2)
            - 2.0 * jnp.dot(jnp.sum(tK, 0), jnp.sum(tL, 0)) / (n - 2))
    return hsic / (n * (n - 3))


if __name__ == "__main__":
    key = jax.random.PRNGKey(0)
    k1, k2, k3, k4 = jax.random.split(key, 4)

    # Case 1: original small shape (single tile, no padding, no masking).
    N, D = 8, 32
    sigma_x, sigma_y = 1.0, 2.0
    x = jax.random.normal(k1, (N, D), dtype=jnp.float32)
    y = jax.random.normal(k2, (N, D), dtype=jnp.float32)
    out = jax.block_until_ready(hsic_unbiased(x, y, sigma_x, sigma_y))
    ref = _hsic_unbiased_ref(x, y, sigma_x, sigma_y)
    assert jnp.allclose(out, ref, rtol=1e-4, atol=1e-6), (out, ref)

    # Case 2: N not a multiple of 8, D not lane-aligned (exercises row/col
    # padding + column masking).
    N2, D2 = 20, 10
    x2 = jax.random.normal(k3, (N2, D2), dtype=jnp.float32)
    y2 = 0.5 * x2 + 0.1 * jax.random.normal(k4, (N2, D2), dtype=jnp.float32)
    out2 = jax.block_until_ready(hsic_unbiased(x2, y2, 1.5))
    ref2 = _hsic_unbiased_ref(x2, y2, 1.5, 1.5)
    assert jnp.allclose(out2, ref2, rtol=1e-4, atol=1e-6), (out2, ref2)

    # Case 3: forced 128-tile -> multi-block grid with masked tail (exercises
    # the accumulate-over-j path and the pl.when init).
    N3, D3 = 200, 48
    x3 = jax.random.normal(k1, (N3, D3), dtype=jnp.float32)
    y3 = jnp.tanh(x3[:, :32]) + 0.05 * jax.random.normal(
        k2, (N3, 32), dtype=jnp.float32)
    sx = float(jnp.sqrt(2.0 * D3))
    sy = float(jnp.sqrt(2.0 * 32))
    out3 = jax.block_until_ready(hsic_unbiased(x3, y3, sx, sy, tile=128))
    ref3 = _hsic_unbiased_ref(x3, y3, sx, sy)
    assert jnp.allclose(out3, ref3, rtol=1e-2, atol=5e-5), (out3, ref3)

    print("KERNEL_OK")
</pallas_src>

<mosaic_0001>
module attributes {stable_mosaic.version = 11 : i64} {
  func.func @_hsic_tile_kernel(%arg0: i32, %arg1: i32, %arg2: memref<8x128xf32, #tpu.memory_space<vmem>>, %arg3: memref<8x128xf32, #tpu.memory_space<vmem>>, %arg4: memref<8x128xf32, #tpu.memory_space<vmem>>, %arg5: memref<8x128xf32, #tpu.memory_space<vmem>>, %arg6: memref<8x1xf32, #tpu.memory_space<vmem>>, %arg7: memref<1x8xf32, #tpu.memory_space<vmem>>, %arg8: memref<8x1xf32, #tpu.memory_space<vmem>>, %arg9: memref<1x8xf32, #tpu.memory_space<vmem>>, %arg10: memref<8x1xf32, #tpu.memory_space<vmem>>, %arg11: memref<8x1xf32, #tpu.memory_space<vmem>>, %arg12: memref<8x1xf32, #tpu.memory_space<vmem>>) attributes {dimension_semantics = [#tpu.dimension_semantics<parallel>, #tpu.dimension_semantics<arbitrary>], iteration_bounds = array<i64: 1, 1>, scalar_prefetch = 0 : i64, scratch_operands = 0 : i64, tpu.core_type = #tpu.core_type<tc>, window_params = [{transform_indices = @transform_0, window_bounds = array<i64: 8, 128>}, {transform_indices = @transform_1, window_bounds = array<i64: 8, 128>}, {transform_indices = @transform_2, window_bounds = array<i64: 8, 128>}, {transform_indices = @transform_3, window_bounds = array<i64: 8, 128>}, {transform_indices = @transform_4, window_bounds = array<i64: 8, 1>}, {transform_indices = @transform_5, window_bounds = array<i64: 1, 8>}, {transform_indices = @transform_6, window_bounds = array<i64: 8, 1>}, {transform_indices = @transform_7, window_bounds = array<i64: 1, 8>}, {transform_indices = @transform_8, window_bounds = array<i64: 8, 1>}, {transform_indices = @transform_9, window_bounds = array<i64: 8, 1>}, {transform_indices = @transform_10, window_bounds = array<i64: 8, 1>}]} {
    %c0_i32 = arith.constant 0 : i32
    %0 = arith.cmpi eq, %arg1, %c0_i32 : i32
    %1 = arith.extui %0 : i1 to i32
    %c0_i32_0 = arith.constant 0 : i32
    %2 = arith.cmpi ne, %1, %c0_i32_0 : i32
    scf.if %2 {
      %cst_38 = arith.constant 0.000000e+00 : f32
      %51 = vector.broadcast %cst_38 : f32 to vector<8x1xf32>
      %c0_39 = arith.constant 0 : index
      %c0_40 = arith.constant 0 : index
      %52 = vector.load %arg10[%c0_39, %c0_40] : memref<8x1xf32, #tpu.memory_space<vmem>>, vector<8x1xf32>
      tpu.vector_store %arg10[%c0_39, %c0_40], %51 {strides = array<i32>} : memref<8x1xf32, #tpu.memory_space<vmem>>, vector<8x1xf32>,
      %cst_41 = arith.constant 0.000000e+00 : f32
      %53 = vector.broadcast %cst_41 : f32 to vector<8x1xf32>
      %c0_42 = arith.constant 0 : index
      %c0_43 = arith.constant 0 : index
      %54 = vector.load %arg11[%c0_42, %c0_43] : memref<8x1xf32, #tpu.memory_space<vmem>>, vector<8x1xf32>
      tpu.vector_store %arg11[%c0_42, %c0_43], %53 {strides = array<i32>} : memref<8x1xf32, #tpu.memory_space<vmem>>, vector<8x1xf32>,
      %cst_44 = arith.constant 0.000000e+00 : f32
      %55 = vector.broadcast %cst_44 : f32 to vector<8x1xf32>
      %c0_45 = arith.constant 0 : index
      %c0_46 = arith.constant 0 : index
      %56 = vector.load %arg12[%c0_45, %c0_46] : memref<8x1xf32, #tpu.memory_space<vmem>>, vector<8x1xf32>
      tpu.vector_store %arg12[%c0_45, %c0_46], %55 {strides = array<i32>} : memref<8x1xf32, #tpu.memory_space<vmem>>, vector<8x1xf32>,
    } else {
    }
    %c0 = arith.constant 0 : index
    %c0_1 = arith.constant 0 : index
    %3 = vector.load %arg2[%c0, %c0_1] : memref<8x128xf32, #tpu.memory_space<vmem>>, vector<8x128xf32>
    %c0_2 = arith.constant 0 : index
    %c0_3 = arith.constant 0 : index
    %4 = vector.load %arg3[%c0_2, %c0_3] : memref<8x128xf32, #tpu.memory_space<vmem>>, vector<8x128xf32>
    %cst = arith.constant dense<0.000000e+00> : vector<8x8xf32>
    %5 = tpu.matmul %3, %4, %cst {dimension_numbers = #tpu.dot_dimension_numbers<[1], [1], [0], [0], [0, 0, 1, 0], [], []>} : vector<8x128xf32>, vector<8x128xf32>, vector<8x8xf32> -> vector<8x8xf32>
    %c0_4 = arith.constant 0 : index
    %c0_5 = arith.constant 0 : index
    %6 = vector.load %arg4[%c0_4, %c0_5] : memref<8x128xf32, #tpu.memory_space<vmem>>, vector<8x128xf32>
    %c0_6 = arith.constant 0 : index
    %c0_7 = arith.constant 0 : index
    %7 = vector.load %arg5[%c0_6, %c0_7] : memref<8x128xf32, #tpu.memory_space<vmem>>, vector<8x128xf32>
    %cst_8 = arith.constant dense<0.000000e+00> : vector<8x8xf32>
    %8 = tpu.matmul %6, %7, %cst_8 {dimension_numbers = #tpu.dot_dimension_numbers<[1], [1], [0], [0], [0, 0, 1, 0], [], []>} : vector<8x128xf32>, vector<8x128xf32>, vector<8x8xf32> -> vector<8x8xf32>
    %c0_9 = arith.constant 0 : index
    %c0_10 = arith.constant 0 : index
    %9 = vector.load %arg6[%c0_9, %c0_10] : memref<8x1xf32, #tpu.memory_space<vmem>>, vector<8x1xf32>
    %c0_11 = arith.constant 0 : index
    %c0_12 = arith.constant 0 : index
    %10 = vector.load %arg7[%c0_11, %c0_12] : memref<1x8xf32, #tpu.memory_space<vmem>>, vector<1x8xf32>
    %11 = vector.broadcast %9 : vector<8x1xf32> to vector<8x8xf32>
    %12 = vector.broadcast %10 : vector<1x8xf32> to vector<8x8xf32>
    %13 = arith.addf %11, %12 : vector<8x8xf32>
    %cst_13 = arith.constant 2.000000e+00 : f32
    %14 = vector.broadcast %cst_13 : f32 to vector<8x8xf32>
    %15 = arith.mulf %14, %5 : vector<8x8xf32>
    %16 = arith.subf %13, %15 : vector<8x8xf32>
    %c0_14 = arith.constant 0 : index
    %c0_15 = arith.constant 0 : index
    %17 = vector.load %arg8[%c0_14, %c0_15] : memref<8x1xf32, #tpu.memory_space<vmem>>, vector<8x1xf32>
    %c0_16 = arith.constant 0 : index
    %c0_17 = arith.constant 0 : index
    %18 = vector.load %arg9[%c0_16, %c0_17] : memref<1x8xf32, #tpu.memory_space<vmem>>, vector<1x8xf32>
    %19 = vector.broadcast %17 : vector<8x1xf32> to vector<8x8xf32>
    %20 = vector.broadcast %18 : vector<1x8xf32> to vector<8x8xf32>
    %21 = arith.addf %19, %20 : vector<8x8xf32>
    %cst_18 = arith.constant 2.000000e+00 : f32
    %22 = vector.broadcast %cst_18 : f32 to vector<8x8xf32>
    %23 = arith.mulf %22, %8 : vector<8x8xf32>
    %24 = arith.subf %21, %23 : vector<8x8xf32>
    %cst_19 = arith.constant -5.000000e-01 : f32
    %25 = vector.broadcast %cst_19 : f32 to vector<8x8xf32>
    %26 = arith.mulf %25, %16 : vector<8x8xf32>
    %27 = math.exp %26 : vector<8x8xf32>
    %cst_20 = arith.constant 1.000000e+00 : f32
    %28 = vector.broadcast %cst_20 : f32 to vector<8x8xf32>
    %29 = arith.subf %27, %28 : vector<8x8xf32>
    %cst_21 = arith.constant -1.250000e-01 : f32
    %30 = vector.broadcast %cst_21 : f32 to vector<8x8xf32>
    %31 = arith.mulf %30, %24 : vector<8x8xf32>
    %32 = math.exp %31 : vector<8x8xf32>
    %cst_22 = arith.constant 1.000000e+00 : f32
    %33 = vector.broadcast %cst_22 : f32 to vector<8x8xf32>
    %34 = arith.subf %32, %33 : vector<8x8xf32>
    %c0_23 = arith.constant 0 : index
    %c0_24 = arith.constant 0 : index
    %35 = vector.load %arg10[%c0_23, %c0_24] : memref<8x1xf32, #tpu.memory_space<vmem>>, vector<8x1xf32>
    %36 = arith.mulf %29, %34 : vector<8x8xf32>
    %cst_25 = arith.constant dense<0.000000e+00> : vector<8xf32>
    %37 = vector.multi_reduction <add>, %36, %cst_25 [1] : vector<8x8xf32> to vector<8xf32>
    %38 = vector.shape_cast %37 : vector<8xf32> to vector<8x1xf32>
    %39 = arith.addf %35, %38 : vector<8x1xf32>
    %c0_26 = arith.constant 0 : index
    %c0_27 = arith.constant 0 : index
    %40 = vector.load %arg10[%c0_26, %c0_27] : memref<8x1xf32, #tpu.memory_space<vmem>>, vector<8x1xf32>
    tpu.vector_store %arg10[%c0_26, %c0_27], %39 {strides = array<i32>} : memref<8x1xf32, #tpu.memory_space<vmem>>, vector<8x1xf32>,
    %c0_28 = arith.constant 0 : index
    %c0_29 = arith.constant 0 : index
    %41 = vector.load %arg11[%c0_28, %c0_29] : memref<8x1xf32, #tpu.memory_space<vmem>>, vector<8x1xf32>
    %cst_30 = arith.constant dense<0.000000e+00> : vector<8xf32>
    %42 = vector.multi_reduction <add>, %29, %cst_30 [1] : vector<8x8xf32> to vector<8xf32>
    %43 = vector.shape_cast %42 : vector<8xf32> to vector<8x1xf32>
    %44 = arith.addf %41, %43 : vector<8x1xf32>
    %c0_31 = arith.constant 0 : index
    %c0_32 = arith.constant 0 : index
    %45 = vector.load %arg11[%c0_31, %c0_32] : memref<8x1xf32, #tpu.memory_space<vmem>>, vector<8x1xf32>
    tpu.vector_store %arg11[%c0_31, %c0_32], %44 {strides = array<i32>} : memref<8x1xf32, #tpu.memory_space<vmem>>, vector<8x1xf32>,
    %c0_33 = arith.constant 0 : index
    %c0_34 = arith.constant 0 : index
    %46 = vector.load %arg12[%c0_33, %c0_34] : memref<8x1xf32, #tpu.memory_space<vmem>>, vector<8x1xf32>
    %cst_35 = arith.constant dense<0.000000e+00> : vector<8xf32>
    %47 = vector.multi_reduction <add>, %34, %cst_35 [1] : vector<8x8xf32> to vector<8xf32>
    %48 = vector.shape_cast %47 : vector<8xf32> to vector<8x1xf32>
    %49 = arith.addf %46, %48 : vector<8x1xf32>
    %c0_36 = arith.constant 0 : index
    %c0_37 = arith.constant 0 : index
    %50 = vector.load %arg12[%c0_36, %c0_37] : memref<8x1xf32, #tpu.memory_space<vmem>>, vector<8x1xf32>
    tpu.vector_store %arg12[%c0_36, %c0_37], %49 {strides = array<i32>} : memref<8x1xf32, #tpu.memory_space<vmem>>, vector<8x1xf32>,
    return
  }
  func.func @transform_0(%arg0: i32, %arg1: i32) -> (i32, i32) {
    %c0_i32 = arith.constant 0 : i32
    %c0_i32_0 = arith.constant 0 : i32
    return %arg0, %c0_i32 : i32, i32
  }
  func.func @transform_1(%arg0: i32, %arg1: i32) -> (i32, i32) {
    %c0_i32 = arith.constant 0 : i32
    %c0_i32_0 = arith.constant 0 : i32
    return %arg1, %c0_i32 : i32, i32
  }
  func.func @transform_2(%arg0: i32, %arg1: i32) -> (i32, i32) {
    %c0_i32 = arith.constant 0 : i32
    %c0_i32_0 = arith.constant 0 : i32
    return %arg0, %c0_i32 : i32, i32
  }
  func.func @transform_3(%arg0: i32, %arg1: i32) -> (i32, i32) {
    %c0_i32 = arith.constant 0 : i32
    %c0_i32_0 = arith.constant 0 : i32
    return %arg1, %c0_i32 : i32, i32
  }
  func.func @transform_4(%arg0: i32, %arg1: i32) -> (i32, i32) {
    %c0_i32 = arith.constant 0 : i32
    %c0_i32_0 = arith.constant 0 : i32
    return %arg0, %c0_i32 : i32, i32
  }
  func.func @transform_5(%arg0: i32, %arg1: i32) -> (i32, i32) {
    %c0_i32 = arith.constant 0 : i32
    %c0_i32_0 = arith.constant 0 : i32
    return %c0_i32, %arg1 : i32, i32
  }
  func.func @transform_6(%arg0: i32, %arg1: i32) -> (i32, i32) {
    %c0_i32 = arith.constant 0 : i32
    %c0_i32_0 = arith.constant 0 : i32
    return %arg0, %c0_i32 : i32, i32
  }
  func.func @transform_7(%arg0: i32, %arg1: i32) -> (i32, i32) {
    %c0_i32 = arith.constant 0 : i32
    %c0_i32_0 = arith.constant 0 : i32
    return %c0_i32, %arg1 : i32, i32
  }
  func.func @transform_8(%arg0: i32, %arg1: i32) -> (i32, i32) {
    %c0_i32 = arith.constant 0 : i32
    %c0_i32_0 = arith.constant 0 : i32
    return %arg0, %c0_i32 : i32, i32
  }
  func.func @transform_9(%arg0: i32, %arg1: i32) -> (i32, i32) {
    %c0_i32 = arith.constant 0 : i32
    %c0_i32_0 = arith.constant 0 : i32
    return %arg0, %c0_i32 : i32, i32
  }
  func.func @transform_10(%arg0: i32, %arg1: i32) -> (i32, i32) {
    %c0_i32 = arith.constant 0 : i32
    %c0_i32_0 = arith.constant 0 : i32
    return %arg0, %c0_i32 : i32, i32
  }
}

</mosaic_0001>

<llo_original>
// kernel: tpu_custom_call.1
$region0: #{tpu_custom_call.1}
  #allocation0 [shape = 'u32[]', space=smem, size = 0x4, offset = 0x4, fixed_abs, tag = 'smem constant byte address 0x4 - core index']
  #allocation1 [shape = 'u32[144,128]{1,0:T(1,128)}', space=vmem, size = 0x12000, scoped, tag = 'internal scratch']
  %s0 = inlined_call_operand.vmem [shape: f32[8,128], index: 0, kind: input, shape index: {}]
  %s1 = inlined_call_operand.vmem [shape: f32[8,128], index: 1, kind: input, shape index: {}]
  %s2 = inlined_call_operand.vmem [shape: f32[8,128], index: 2, kind: input, shape index: {}]
  %s3 = inlined_call_operand.hbm [shape: f32[8,128], index: 3, kind: input, shape index: {}]
  %s4 = inlined_call_operand.vmem [shape: f32[8,1], index: 4, kind: input, shape index: {}]
  %s5 = inlined_call_operand.vmem [shape: f32[1,8], index: 5, kind: input, shape index: {}]
  %s6 = inlined_call_operand.vmem [shape: f32[8,1], index: 6, kind: input, shape index: {}]
  %s7 = inlined_call_operand.vmem [shape: f32[1,8], index: 7, kind: input, shape index: {}]
  %s8 = inlined_call_operand.vmem [shape: f32[8,1], index: 8, kind: output, shape index: {0}]
  %s9 = inlined_call_operand.vmem [shape: f32[8,1], index: 9, kind: output, shape index: {1}]
  %s10 = inlined_call_operand.vmem [shape: f32[8,1], index: 10, kind: output, shape index: {2}]
  %11 = xla_tuple %s8, %s9, %s10
  %s12 = sld [smem:[#allocation0]]
  $region66: #{tpu_custom_call.1} parent=0
    _
  %s14 = ssub.s32 1, %s12
  %s15 = scalar_select 0, %s14, %s12
  $region1: #{tpu_custom_call.1} parent=0
    #allocation2 [shape = 'u8[4096]{0}', space=vmem, size = 0x1000, scoped, tag = 'input window, operand 3, single buffered']
    #allocation3 [shape = 's32[1]{0}', space=sflag, size = 0x4, scoped, tag = 'scoped memory for tpu_custom_call.1']
    %16 = vsyncpa [#allocation3], 0
    // Predicated region
    $region2: #{tpu_custom_call.1} parent=1 // pred_check
      _
    $region3: #{tpu_custom_call.1} parent=1 // pred_check_branch
      %18 = sbr.rel (0) target = $region5
    $region4: #{tpu_custom_call.1} parent=1 // pred_region
      _
    $region5: #{tpu_custom_call.1} parent=1 // pred_fallthru
      _
    // Predicated region
    $region6: #{tpu_custom_call.1} parent=1 // pred_check
      _
    $region7: #{tpu_custom_call.1} parent=1 // pred_check_branch
      %20 = sbr.rel (0) target = $region9
    $region8: #{tpu_custom_call.1} parent=1 // pred_region
      _
    $region9: #{tpu_custom_call.1} parent=1 // pred_fallthru
      _
    // Predicated region
    $region10: #{tpu_custom_call.1} parent=1 // pred_check
      _
    $region11: #{tpu_custom_call.1} parent=1 // pred_check_branch
      %22 = sbr.rel (0) target = $region13
    $region12: #{tpu_custom_call.1} parent=1 // pred_region
      _
    $region13: #{tpu_custom_call.1} parent=1 // pred_fallthru
      _
    // Predicated region
    $region14: #{tpu_custom_call.1} parent=1 // pred_check
      _
    $region15: #{tpu_custom_call.1} parent=1 // pred_check_branch
      %24 = sbr.rel (0) target = $region17
    $region16: #{tpu_custom_call.1} parent=1 // pred_region
      %s26 = ssub.s32 128, 128
      %27 = vsyncadd [#allocation3], %s26
      %s29 = sshll.u32 [#allocation2], 4
      %s30 = int_to_ptr.vmem [resolvable:$true] %s29
      %32 = dma.hbm_to_vmem [thread:$0]  %s3, 128, %s30, [#allocation3]
    $region17: #{tpu_custom_call.1} parent=1 // pred_fallthru
      _
    // Predicated region
    $region18: #{tpu_custom_call.1} parent=1 // pred_check
      _
    $region19: #{tpu_custom_call.1} parent=1 // pred_check_branch
      %34 = sbr.rel (0) target = $region21
    $region20: #{tpu_custom_call.1} parent=1 // pred_region
      _
    $region21: #{tpu_custom_call.1} parent=1 // pred_fallthru
      _
    // Predicated region
    $region22: #{tpu_custom_call.1} parent=1 // pred_check
      _
    $region23: #{tpu_custom_call.1} parent=1 // pred_check_branch
      %36 = sbr.rel (0) target = $region25
    $region24: #{tpu_custom_call.1} parent=1 // pred_region
      _
    $region25: #{tpu_custom_call.1} parent=1 // pred_fallthru
      _
    // Predicated region
    $region26: #{tpu_custom_call.1} parent=1 // pred_check
      _
    $region27: #{tpu_custom_call.1} parent=1 // pred_check_branch
      %38 = sbr.rel (0) target = $region29
    $region28: #{tpu_custom_call.1} parent=1 // pred_region
      _
    $region29: #{tpu_custom_call.1} parent=1 // pred_fallthru
      _
    // Predicated region
    $region30: #{tpu_custom_call.1} parent=1 // pred_check
      _
    $region31: #{tpu_custom_call.1} parent=1 // pred_check_branch
      %40 = sbr.rel (0) target = $region33
    $region32: #{tpu_custom_call.1} parent=1 // pred_region
      _
    $region33: #{tpu_custom_call.1} parent=1 // pred_fallthru
      _
    // Predicated region
    $region34: #{tpu_custom_call.1} parent=1 // pred_check
      _
    $region35: #{tpu_custom_call.1} parent=1 // pred_check_branch
      %42 = sbr.rel (0) target = $region37
    $region36: #{tpu_custom_call.1} parent=1 // pred_region
      %43 = dma.done [#allocation3], 128
    $region37: #{tpu_custom_call.1} parent=1 // pred_fallthru
      _
    %p44 = scmp.eq.s32.totalorder 0, 0
    // Predicated region
    $region38: #{tpu_custom_call.1} parent=1 // pred_check
      %p45 = pneg %p44
    $region39: #{tpu_custom_call.1} parent=1 // pred_check_branch
      %47 = sbr.rel (%p45) target = $region41
    $region40: #{tpu_custom_call.1} parent=1 // pred_region
      %vm48 = vcmask 7168
      %49 = vst.msk [vmem:[%s8] sm:$0xff] %vm48, 0.0
      %50 = vst.msk [vmem:[%s9] sm:$0xff] %vm48, 0.0
      %51 = vst.msk [vmem:[%s10] sm:$0xff] %vm48, 0.0
    $region41: #{tpu_custom_call.1} parent=1 // pred_fallthru
      _
    %v52 = vld [vmem:[%s0] sm:$0xff]
    %v53 = vld [vmem:[%s1] sm:$0xff]
    %54 = vmatprep.subr.mxu0 0.0
    %55 = vmatpush1.xpose.msra.mxu0 %v53
    %56 = vmatprep.subr.mxu0 0.0
    %57 = vmatpush1.xpose.msra.mxu0 0.0
    %58 = vmatprep.subr.mxu0 0.0
    %59 = vmatpush1.xpose.msra.mxu0 0.0
    %60 = vmatprep.subr.mxu0 0.0
    %61 = vmatpush1.xpose.msra.mxu0 0.0
    %62 = vmatprep.subr.mxu0 0.0
    %63 = vmatpush1.xpose.msra.mxu0 0.0
    %64 = vmatprep.subr.mxu0 0.0
    %65 = vmatpush1.xpose.msra.mxu0 0.0
    %66 = vmatprep.subr.mxu0 0.0
    %67 = vmatpush1.xpose.msra.mxu0 0.0
    %68 = vmatprep.subr.mxu0 0.0
    %69 = vmatpush1.xpose.msra.mxu0 0.0
    %70 = vmatprep.subr.mxu0 0.0
    %71 = vmatpush1.xpose.msra.mxu0 0.0
    %72 = vmatprep.subr.mxu0 0.0
    %73 = vmatpush1.xpose.msra.mxu0 0.0
    %74 = vmatprep.subr.mxu0 0.0
    %75 = vmatpush1.xpose.msra.mxu0 0.0
    %76 = vmatprep.subr.mxu0 0.0
    %77 = vmatpush1.xpose.msra.mxu0 0.0
    %78 = vmatprep.subr.mxu0 0.0
    %79 = vmatpush1.xpose.msra.mxu0 0.0
    %80 = vmatprep.subr.mxu0 0.0
    %81 = vmatpush1.xpose.msra.mxu0 0.0
    %82 = vmatprep.subr.mxu0 0.0
    %83 = vmatpush1.xpose.msra.mxu0 0.0
    %84 = vmatprep.subr.mxu0 0.0
    %85 = vmatpush1.xpose.msra.mxu0 0.0
    %86 = vmatprep.subr.mxu0 0.0
    %87 = vmatpush1.xpose.msra.mxu0 0.0
    %88 = vmatprep.subr.mxu0 0.0
    %89 = vmatpush1.xpose.msra.mxu0 0.0
    %90 = vmatprep.subr.mxu0 0.0
    %91 = vmatpush1.xpose.msra.mxu0 0.0
    %92 = vmatprep.subr.mxu0 0.0
    %93 = vmatpush1.xpose.msra.mxu0 0.0
    %94 = vmatprep.subr.mxu0 0.0
    %95 = vmatpush1.xpose.msra.mxu0 0.0
    %96 = vmatprep.subr.mxu0 0.0
    %97 = vmatpush1.xpose.msra.mxu0 0.0
    %98 = vmatprep.subr.mxu0 0.0
    %99 = vmatpush1.xpose.msra.mxu0 0.0
    %100 = vmatprep.subr.mxu0 0.0
    %101 = vmatpush1.xpose.msra.mxu0 0.0
    %102 = vmatprep.subr.mxu0 0.0
    %103 = vmatpush1.xpose.msra.mxu0 0.0
    %104 = vmatprep.subr.mxu0 0.0
    %105 = vmatpush1.xpose.msra.mxu0 0.0
    %106 = vmatprep.subr.mxu0 0.0
    %107 = vmatpush1.xpose.msra.mxu0 0.0
    %108 = vmatprep.subr.mxu0 0.0
    %109 = vmatpush1.xpose.msra.mxu0 0.0
    %110 = vmatprep.subr.mxu0 0.0
    %111 = vmatpush1.xpose.msra.mxu0 0.0
    %112 = vmatprep.subr.mxu0 0.0
    %113 = vmatpush1.xpose.msra.mxu0 0.0
    %114 = vmatprep.subr.mxu0 0.0
    %115 = vmatpush1.xpose.msra.mxu0 0.0
    %116 = vmatprep.subr.mxu0 0.0
    %117 = vmatpush1.xpose.msra.mxu0 0.0
    %118 = vmatprep.mubr.f32.mxu0 0.0
    %119 = vmatmul.mubr.f32.gmra.mrb[0].mxu0 %v52
    %v120 = vpop.f32.mrb[0].mxu0
    %v121 = vadd.f32 0.0, %v120
    %v122 = vpop.f32.mrb[0].mxu0
    %123 = vdwg.mxu0
    %v124 = vld [vmem:[%s2] sm:$0xff]
    %v125 = vld [vmem:[#allocation2] sm:$0xff]
    %126 = vmatprep.subr.mxu0 0.0
    %127 = vmatpush1.xpose.msra.mxu0 %v125
    %128 = vmatprep.subr.mxu0 0.0
    %129 = vmatpush1.xpose.msra.mxu0 0.0
    %130 = vmatprep.subr.mxu0 0.0
    %131 = vmatpush1.xpose.msra.mxu0 0.0
    %132 = vmatprep.subr.mxu0 0.0
    %133 = vmatpush1.xpose.msra.mxu0 0.0
    %134 = vmatprep.subr.mxu0 0.0
    %135 = vmatpush1.xpose.msra.mxu0 0.0
    %136 = vmatprep.subr.mxu0 0.0
    %137 = vmatpush1.xpose.msra.mxu0 0.0
    %138 = vmatprep.subr.mxu0 0.0
    %139 = vmatpush1.xpose.msra.mxu0 0.0
    %140 = vmatprep.subr.mxu0 0.0
    %141 = vmatpush1.xpose.msra.mxu0 0.0
    %142 = vmatprep.subr.mxu0 0.0
    %143 = vmatpush1.xpose.msra.mxu0 0.0
    %144 = vmatprep.subr.mxu0 0.0
    %145 = vmatpush1.xpose.msra.mxu0 0.0
    %146 = vmatprep.subr.mxu0 0.0
    %147 = vmatpush1.xpose.msra.mxu0 0.0
    %148 = vmatprep.subr.mxu0 0.0
    %149 = vmatpush1.xpose.msra.mxu0 0.0
    %150 = vmatprep.subr.mxu0 0.0
    %151 = vmatpush1.xpose.msra.mxu0 0.0
    %152 = vmatprep.subr.mxu0 0.0
    %153 = vmatpush1.xpose.msra.mxu0 0.0
    %154 = vmatprep.subr.mxu0 0.0
    %155 = vmatpush1.xpose.msra.mxu0 0.0
    %156 = vmatprep.subr.mxu0 0.0
    %157 = vmatpush1.xpose.msra.mxu0 0.0
    %158 = vmatprep.subr.mxu0 0.0
    %159 = vmatpush1.xpose.msra.mxu0 0.0
    %160 = vmatprep.subr.mxu0 0.0
    %161 = vmatpush1.xpose.msra.mxu0 0.0
    %162 = vmatprep.subr.mxu0 0.0
    %163 = vmatpush1.xpose.msra.mxu0 0.0
    %164 = vmatprep.subr.mxu0 0.0
    %165 = vmatpush1.xpose.msra.mxu0 0.0
    %166 = vmatprep.subr.mxu0 0.0
    %167 = vmatpush1.xpose.msra.mxu0 0.0
    %168 = vmatprep.subr.mxu0 0.0
    %169 = vmatpush1.xpose.msra.mxu0 0.0
    %170 = vmatprep.subr.mxu0 0.0
    %171 = vmatpush1.xpose.msra.mxu0 0.0
    %172 = vmatprep.subr.mxu0 0.0
    %173 = vmatpush1.xpose.msra.mxu0 0.0
    %174 = vmatprep.subr.mxu0 0.0
    %175 = vmatpush1.xpose.msra.mxu0 0.0
    %176 = vmatprep.subr.mxu0 0.0
    %177 = vmatpush1.xpose.msra.mxu0 0.0
    %178 = vmatprep.subr.mxu0 0.0
    %179 = vmatpush1.xpose.msra.mxu0 0.0
    %180 = vmatprep.subr.mxu0 0.0
    %181 = vmatpush1.xpose.msra.mxu0 0.0
    %182 = vmatprep.subr.mxu0 0.0
    %183 = vmatpush1.xpose.msra.mxu0 0.0
    %184 = vmatprep.subr.mxu0 0.0
    %185 = vmatpush1.xpose.msra.mxu0 0.0
    %186 = vmatprep.subr.mxu0 0.0
    %187 = vmatpush1.xpose.msra.mxu0 0.0
    %188 = vmatprep.subr.mxu0 0.0
    %189 = vmatpush1.xpose.msra.mxu0 0.0
    %190 = vmatprep.mubr.f32.mxu0 0.0
    %191 = vmatmul.mubr.f32.gmra.mrb[0].mxu0 %v124
    %v192 = vpop.f32.mrb[0].mxu0
    %v193 = vadd.f32 0.0, %v192
    %v194 = vpop.f32.mrb[0].mxu0
    %195 = vdwg.mxu0
    %v196 = vld [vmem:[%s4] sm:$0xff]
    %v197 = vld [vmem:[%s5] sm:$0x1]
    %199 = vset.pattern.permute.xlu0 0
    %200 = vperm.xlu0 %199, %v196
    %v201 = vpop.permute.xlu0 %200
    %v204 = vlaneseq
    %v205 = vshrl.u32 %v204, 7
    %v206 = vsub.s32 0, %v205
    %v207 = vrot.slane %v197, %v206
    %v209 = vadd.f32 %v201, %v207
    %v210 = vmul.f32 %v121, 2.0
    %v211 = vsub.f32 %v209, %v210
    %v212 = vld [vmem:[%s6] sm:$0xff]
    %v213 = vld [vmem:[%s7] sm:$0x1]
    %215 = vset.pattern.permute.xlu0 0
    %216 = vperm.xlu0 %215, %v212
    %v217 = vpop.permute.xlu0 %216
    %v220 = vlaneseq
    %v221 = vshrl.u32 %v220, 7
    %v222 = vsub.s32 0, %v221
    %v223 = vrot.slane %v213, %v222
    %v225 = vadd.f32 %v217, %v223
    %v226 = vmul.f32 %v193, 2.0
    %v227 = vsub.f32 %v225, %v226
    %v228 = vmul.f32 %v211, -0.5
    %v229 = vmul.f32 %v228, 1.442695
    %v230 = vpow.pop %v229
    %v231 = vsub.f32 %v230, 1.0
    %v232 = vmul.f32 %v227, -0.125
    %v233 = vmul.f32 %v232, 1.442695
    %v234 = vpow.pop %v233
    %v235 = vsub.f32 %v234, 1.0
    %v236 = vld [vmem:[%s8] sm:$0xff]
    %v237 = vmul.f32 %v231, %v235
    %vm238 = vcmask 64512
    %v239 = vsel %vm238, %v237, 0.0
    %240 = vadd.xlane.f32.xlu0 %v239
    %v241 = vpop.xlane.xlu0 %240
    %v242 = vadd.f32 %v236, %v241
    %vm243 = vcmask 7168
    %244 = vst.msk [vmem:[%s8] sm:$0xff] %vm243, %v242
    %v245 = vld [vmem:[%s9] sm:$0xff]
    %v246 = vsel %vm238, %v231, 0.0
    %247 = vadd.xlane.f32.xlu0 %v246
    %v248 = vpop.xlane.xlu0 %247
    %v249 = vadd.f32 %v245, %v248
    %250 = vst.msk [vmem:[%s9] sm:$0xff] %vm243, %v249
    %v251 = vld [vmem:[%s10] sm:$0xff]
    %v252 = vsel %vm238, %v235, 0.0
    %253 = vadd.xlane.f32.xlu0 %v252
    %v254 = vpop.xlane.xlu0 %253
    %v255 = vadd.f32 %v251, %v254
    %256 = vst.msk [vmem:[%s10] sm:$0xff] %vm243, %v255
    // Predicated region
    $region42: #{tpu_custom_call.1} parent=1 // pred_check
      _
    $region43: #{tpu_custom_call.1} parent=1 // pred_check_branch
      %258 = sbr.rel (0) target = $region45
    $region44: #{tpu_custom_call.1} parent=1 // pred_region
      _
    $region45: #{tpu_custom_call.1} parent=1 // pred_fallthru
      _
    // Predicated region
    $region46: #{tpu_custom_call.1} parent=1 // pred_check
      _
    $region47: #{tpu_custom_call.1} parent=1 // pred_check_branch
      %260 = sbr.rel (0) target = $region49
    $region48: #{tpu_custom_call.1} parent=1 // pred_region
      _
    $region49: #{tpu_custom_call.1} parent=1 // pred_fallthru
      _
    // Predicated region
    $region50: #{tpu_custom_call.1} parent=1 // pred_check
      _
    $region51: #{tpu_custom_call.1} parent=1 // pred_check_branch
      %262 = sbr.rel (0) target = $region53
    $region52: #{tpu_custom_call.1} parent=1 // pred_region
      _
    $region53: #{tpu_custom_call.1} parent=1 // pred_fallthru
      _
    // Predicated region
    $region54: #{tpu_custom_call.1} parent=1 // pred_check
      _
    $region55: #{tpu_custom_call.1} parent=1 // pred_check_branch
      %264 = sbr.rel (0) target = $region57
    $region56: #{tpu_custom_call.1} parent=1 // pred_region
      _
    $region57: #{tpu_custom_call.1} parent=1 // pred_fallthru
      _
    // Predicated region
    $region58: #{tpu_custom_call.1} parent=1 // pred_check
      _
    $region59: #{tpu_custom_call.1} parent=1 // pred_check_branch
      %266 = sbr.rel (0) target = $region61
    $region60: #{tpu_custom_call.1} parent=1 // pred_region
      _
    $region61: #{tpu_custom_call.1} parent=1 // pred_fallthru
      _
    // Predicated region
    $region62: #{tpu_custom_call.1} parent=1 // pred_check
      _
    $region63: #{tpu_custom_call.1} parent=1 // pred_check_branch
      %268 = sbr.rel (0) target = $region65
    $region64: #{tpu_custom_call.1} parent=1 // pred_region
      _
    $region65: #{tpu_custom_call.1} parent=1 // pred_fallthru
      _
    %269 = vsyncpa [#allocation3], 1

</llo_original>
